<compile_context>
chip_gen: v6e
topology: v6e:2x2x1
jax: 0.10.0
libtpu: 0.0.40
codegen_flags: <defaults>
</compile_context>

<pallas_src>
import functools

import jax
import jax.numpy as jnp
from jax.experimental import pallas as pl
from jax.experimental.pallas import tpu as pltpu


_CHUNK = 1024      # lane sub-tile for the in-kernel chunked dot
_SMALL_HW = 1024   # spatial extent below which batches are folded per block


def _round_up(x, m):
    return ((x + m - 1) // m) * m


def _class_head_tiled_kernel(w_ref, x_ref, b_ref, o_ref, *, chunk, n_chunks):
    """Path A (large feature maps): one (squeezed) batch, lane-dense spatial tile.

    w_ref: (Cout, Cin)   resident weight
    x_ref: (Cin, t_hw)   activation tile, native NCHW orientation (lane-dense)
    b_ref: (Cout, 1)     f32 bias
    o_ref: (Cout, t_hw)  lane-dense output tile
    """
    w = w_ref[...]
    b = b_ref[...]
    # Chunk the MXU dot + epilogue so the f32 accumulator stays small even
    # though the DMA block (t_hw lanes) is large; each chunk stores immediately.
    for c in range(n_chunks):  # static trip count, static slices (zero-cost views)
        sl = slice(c * chunk, (c + 1) * chunk)
        acc = jnp.dot(w, x_ref[:, sl], preferred_element_type=jnp.float32)
        o_ref[:, sl] = (acc + b).astype(o_ref.dtype)


def _class_head_batched_kernel(w_ref, x_ref, b_ref, o_ref):
    """Path B (small feature maps): fold Nb batch items into one block.

    w_ref: (Cout, Cin), x_ref: (Nb, Cin, hw), b_ref: (Cout, 1), o_ref: (Nb, Cout, hw)
    """
    w = w_ref[...]
    b = b_ref[...]
    for i in range(x_ref.shape[0]):  # Nb is a small static block dim
        acc = jnp.dot(w, x_ref[i], preferred_element_type=jnp.float32)
        o_ref[i] = (acc + b).astype(o_ref.dtype)


def _pick_spatial_tile(hw, cin, itemsize, n, block_bytes, max_t_hw,
                       chunk=_CHUNK, min_grid_points=4):
    """Largest chunk-multiple spatial tile within the block byte budget."""
    t = block_bytes // max(1, cin * itemsize)
    t = min(t, max_t_hw, _round_up(hw, chunk))
    t = max(chunk, (t // chunk) * chunk)
    # Keep enough program points that both v7x TensorCores (and the pipeline)
    # have work; never go below one chunk.
    while t > chunk and n * ((hw + t - 1) // t) < min_grid_points:
        t = max(chunk, ((t // 2) // chunk) * chunk)
    return t


def class_head_forward(x_nchw, weight, bias, num_anchors=3, *,
                       block_bytes=4 << 20, max_t_hw=16384):
    """Pallas implementation of ClassHead.forward.

    Args:
      x_nchw: (N, Cin, H, W) input, PyTorch NCHW convention.  bf16 contract:
        pass bf16 activations to halve HBM traffic — this wrapper deliberately
        does NOT cast x (a wrapper-side cast would be an extra full HBM pass).
      weight: (Cout, Cin) 1x1-conv weight (PyTorch weight[:, :, 0, 0]).
      bias:   (Cout,) bias.
    Returns:
      (N, H*W*num_anchors, 2) array, matching the PyTorch module.

    Channel-layout contract: Cout index = anchor * 2 + class, i.e. the
    nn.Conv2d output ordering (a0c0, a0c1, a1c0, ...); the final view(N,-1,2)
    relies on this ordering.
    """
    N, Cin, H, W = x_nchw.shape
    Cout = weight.shape[0]
    assert Cout == num_anchors * 2, (Cout, num_anchors)

    hw = H * W
    itemsize = jnp.dtype(x_nchw.dtype).itemsize
    # Free, contiguous reshape — activations stay in native NCHW orientation.
    x_flat = x_nchw.reshape(N, Cin, hw)
    # One-time casts: weight matches the activation dtype (mixed-dtype dot
    # would silently promote); bias stays f32, added on the f32 accumulator.
    w2d = weight.astype(x_nchw.dtype)
    b2d = bias.astype(jnp.float32).reshape(Cout, 1)

    cost = pl.CostEstimate(
        flops=2 * N * Cout * Cin * hw,
        transcendentals=0,
        bytes_accessed=(N * hw * (Cin + Cout) + Cout * Cin + Cout) * itemsize,
    )

    if hw <= _SMALL_HW:
        # ---- Path B: batch-folded blocks amortize per-grid-step overhead ----
        nb = max(1, block_bytes // max(1, Cin * hw * itemsize))
        nb = min(nb, N)
        if N >= 2 and pl.cdiv(N, nb) < 2:
            nb = pl.cdiv(N, 2)  # keep >= 2 grid points for v7x megacore
        grid = (pl.cdiv(N, nb),)
        out_ncs = pl.pallas_call(
            _class_head_batched_kernel,
            out_shape=jax.ShapeDtypeStruct((N, Cout, hw), x_nchw.dtype),
            grid_spec=pltpu.PrefetchScalarGridSpec(
                num_scalar_prefetch=0,
                grid=grid,
                in_specs=[
                    # Small weight/bias stay resident across the whole grid.
                    pl.BlockSpec((Cout, Cin), lambda n: (0, 0)),
                    pl.BlockSpec((nb, Cin, hw), lambda n: (n, 0, 0)),
                    pl.BlockSpec((Cout, 1), lambda n: (0, 0)),
                ],
                out_specs=pl.BlockSpec((nb, Cout, hw), lambda n: (n, 0, 0)),
            ),
            compiler_params=pltpu.CompilerParams(
                dimension_semantics=("parallel",)),
            cost_estimate=cost,
        )(w2d, x_flat, b2d)
    else:
        # ---- Path A: large lane-dense spatial tiles, chunked in-kernel dot ----
        t_hw = _pick_spatial_tile(hw, Cin, itemsize, N, block_bytes, max_t_hw)
        chunk = min(_CHUNK, t_hw)
        n_chunks = t_hw // chunk
        grid = (N, pl.cdiv(hw, t_hw))  # ragged tail handled by Pallas masking
        kernel = functools.partial(_class_head_tiled_kernel,
                                   chunk=chunk, n_chunks=n_chunks)
        out_ncs = pl.pallas_call(
            kernel,
            out_shape=jax.ShapeDtypeStruct((N, Cout, hw), x_nchw.dtype),
            grid_spec=pltpu.PrefetchScalarGridSpec(
                num_scalar_prefetch=0,
                grid=grid,
                in_specs=[
                    pl.BlockSpec((Cout, Cin), lambda n, s: (0, 0)),
                    # Activation tile: batch dim squeezed, last dim lane-dense.
                    pl.BlockSpec((None, Cin, t_hw), lambda n, s: (n, 0, s)),
                    pl.BlockSpec((Cout, 1), lambda n, s: (0, 0)),
                ],
                out_specs=pl.BlockSpec((None, Cout, t_hw), lambda n, s: (n, 0, s)),
            ),
            compiler_params=pltpu.CompilerParams(
                dimension_semantics=("parallel", "parallel")),
            cost_estimate=cost,
        )(w2d, x_flat, b2d)

    # Layout glue on the SMALL output tensor: (N, Cout, HW) -> (N, HW, Cout)
    # == permute(0, 2, 3, 1) of the conv output, then view(N, -1, 2).
    # TODO(synk): audit HLO that this transpose fuses with the downstream
    # consumer (concat/softmax); if not, return (N, Cout, hw) and fold it there.
    out_nsc = jnp.swapaxes(out_ncs, 1, 2)
    return out_nsc.reshape(N, hw * num_anchors, 2)


def _reference(x_nchw, weight, bias, num_anchors=3):
    # Pure-JAX reference of the PyTorch forward (for sanity check).
    N, Cin, H, W = x_nchw.shape
    out = jnp.einsum("nchw,oc->nohw", x_nchw, weight,
                     precision=jax.lax.Precision.HIGHEST)
    out = out + bias[None, :, None, None]
    out = jnp.transpose(out, (0, 2, 3, 1))
    return out.reshape(N, -1, 2)


if __name__ == "__main__":
    num_anchors = 3
    Cout = num_anchors * 2
    key = jax.random.PRNGKey(0)
    kx1, kx2, kw, kb = jax.random.split(key, 4)

    # --- Test 1: small feature map (batch-folded path), module-consistent shapes.
    N, Cin, H, W = 2, 64, 16, 16
    x1 = jax.random.normal(kx1, (N, Cin, H, W), dtype=jnp.float32)
    weight = jax.random.normal(kw, (Cout, Cin), dtype=jnp.float32) * 0.05
    bias = jax.random.normal(kb, (Cout,), dtype=jnp.float32) * 0.01

    out1 = jax.block_until_ready(
        class_head_forward(x1, weight, bias, num_anchors=num_anchors))
    ref1 = _reference(x1, weight, bias, num_anchors=num_anchors)
    assert out1.shape == (N, H * W * num_anchors, 2), out1.shape
    assert jnp.allclose(out1, ref1, atol=1e-4, rtol=1e-4)

    # --- Test 2: larger feature map with ragged spatial extent (tiled path,
    # hw = 1600 > 1024 and not a multiple of 128) to exercise block masking.
    H2, W2 = 40, 40
    x2 = jax.random.normal(kx2, (N, Cin, H2, W2), dtype=jnp.float32)
    out2 = jax.block_until_ready(
        class_head_forward(x2, weight, bias, num_anchors=num_anchors))
    ref2 = _reference(x2, weight, bias, num_anchors=num_anchors)
    assert out2.shape == (N, H2 * W2 * num_anchors, 2), out2.shape
    assert jnp.allclose(out2, ref2, atol=1e-4, rtol=1e-4)

    print("KERNEL_OK")
</pallas_src>

<mosaic_0001>
module attributes {stable_mosaic.version = 11 : i64} {
  func.func @_class_head_batched_kernel(%arg0: i32, %arg1: memref<6x64xf32, #tpu.memory_space<vmem>>, %arg2: memref<1x64x256xf32, #tpu.memory_space<vmem>>, %arg3: memref<6x1xf32, #tpu.memory_space<vmem>>, %arg4: memref<1x6x256xf32, #tpu.memory_space<vmem>>) attributes {dimension_semantics = [#tpu.dimension_semantics<parallel>], iteration_bounds = array<i64: 2>, scalar_prefetch = 0 : i64, scratch_operands = 0 : i64, tpu.core_type = #tpu.core_type<tc>, window_params = [{pipeline_mode = #tpu.pipeline_mode<synchronous>, transform_indices = @transform_0, window_bounds = array<i64: 6, 64>}, {transform_indices = @transform_1, window_bounds = array<i64: 1, 64, 256>}, {pipeline_mode = #tpu.pipeline_mode<synchronous>, transform_indices = @transform_2, window_bounds = array<i64: 6, 1>}, {transform_indices = @transform_3, window_bounds = array<i64: 1, 6, 256>}]} {
    %c0 = arith.constant 0 : index
    %c0_0 = arith.constant 0 : index
    %0 = vector.load %arg1[%c0, %c0_0] : memref<6x64xf32, #tpu.memory_space<vmem>>, vector<6x64xf32>
    %c0_1 = arith.constant 0 : index
    %c0_2 = arith.constant 0 : index
    %1 = vector.load %arg3[%c0_1, %c0_2] : memref<6x1xf32, #tpu.memory_space<vmem>>, vector<6x1xf32>
    %c0_3 = arith.constant 0 : index
    %c0_4 = arith.constant 0 : index
    %c0_5 = arith.constant 0 : index
    %2 = vector.load %arg2[%c0_3, %c0_4, %c0_5] : memref<1x64x256xf32, #tpu.memory_space<vmem>>, vector<1x64x256xf32>
    %3 = vector.shape_cast %2 : vector<1x64x256xf32> to vector<64x256xf32>
    %cst = arith.constant dense<0.000000e+00> : vector<6x256xf32>
    %4 = tpu.matmul %0, %3, %cst {dimension_numbers = #tpu.dot_dimension_numbers<[1], [0], [0], [1], [0, 0, 1, 1], [], []>} : vector<6x64xf32>, vector<64x256xf32>, vector<6x256xf32> -> vector<6x256xf32>
    %5 = vector.broadcast %1 : vector<6x1xf32> to vector<6x256xf32>
    %6 = arith.addf %4, %5 : vector<6x256xf32>
    %c0_6 = arith.constant 0 : index
    %c0_7 = arith.constant 0 : index
    %c0_8 = arith.constant 0 : index
    %7 = vector.load %arg4[%c0_6, %c0_7, %c0_8] : memref<1x6x256xf32, #tpu.memory_space<vmem>>, vector<1x6x256xf32>
    %8 = vector.shape_cast %7 : vector<1x6x256xf32> to vector<6x256xf32>
    %9 = vector.shape_cast %6 : vector<6x256xf32> to vector<1x6x256xf32>
    tpu.vector_store %arg4[%c0_6, %c0_7, %c0_8], %9 {strides = array<i32>} : memref<1x6x256xf32, #tpu.memory_space<vmem>>, vector<1x6x256xf32>,
    return
  }
  func.func @transform_0(%arg0: i32) -> (i32, i32) {
    %c0_i32 = arith.constant 0 : i32
    %c0_i32_0 = arith.constant 0 : i32
    %c0_i32_1 = arith.constant 0 : i32
    return %c0_i32, %c0_i32_0 : i32, i32
  }
  func.func @transform_1(%arg0: i32) -> (i32, i32, i32) {
    %c0_i32 = arith.constant 0 : i32
    %c0_i32_0 = arith.constant 0 : i32
    %c0_i32_1 = arith.constant 0 : i32
    return %arg0, %c0_i32, %c0_i32_0 : i32, i32, i32
  }
  func.func @transform_2(%arg0: i32) -> (i32, i32) {
    %c0_i32 = arith.constant 0 : i32
    %c0_i32_0 = arith.constant 0 : i32
    %c0_i32_1 = arith.constant 0 : i32
    return %c0_i32, %c0_i32_0 : i32, i32
  }
  func.func @transform_3(%arg0: i32) -> (i32, i32, i32) {
    %c0_i32 = arith.constant 0 : i32
    %c0_i32_0 = arith.constant 0 : i32
    %c0_i32_1 = arith.constant 0 : i32
    return %arg0, %c0_i32, %c0_i32_0 : i32, i32, i32
  }
}

</mosaic_0001>

<llo_original>
// kernel: tpu_custom_call.1
$region0: #{tpu_custom_call.1}
  #allocation0 [shape = 'u32[]', space=smem, size = 0x4, offset = 0x4, fixed_abs, tag = 'smem constant byte address 0x4 - core index']
  #allocation1 [shape = 'u32[144,128]{1,0:T(1,128)}', space=vmem, size = 0x12000, scoped, tag = 'internal scratch']
  %s0 = inlined_call_operand.vmem [shape: f32[6,64], index: 0, kind: input, shape index: {}]
  %s1 = inlined_call_operand.hbm [shape: f32[2,64,256], index: 1, kind: input, shape index: {}]
  %s2 = inlined_call_operand.vmem [shape: f32[6,1], index: 2, kind: input, shape index: {}]
  %s3 = inlined_call_operand.vmem [shape: f32[2,6,256], index: 3, kind: output, shape index: {}]
  %s4 = sld [smem:[#allocation0]]
  $region49: #{tpu_custom_call.1} parent=0
    _
  %s6 = ssub.s32 1, %s4
  %s7 = scalar_select 0, %s6, %s4
  $region1: #{tpu_custom_call.1} parent=0
    #allocation2 [shape = 'u8[131072]{0}', space=vmem, size = 0x20000, scoped, tag = 'input window, operand 1']
    #allocation3 [shape = 's32[2]{0}', space=sflag, size = 0x8, scoped, tag = 'scoped memory for tpu_custom_call.1']
    %8 = vsyncpa [#allocation3], 0
    %s9 = scalar_lea.sflag [#allocation3], 1
    %10 = vsyncpa %s9, 0
    loop: start=0, step=1, limit=4
    $region2: #{tpu_custom_call.1} parent=1 // loop_pre_header
      _
    $region3: #{tpu_custom_call.1} parent=1 // loop_header
      %s12 = sphi 0, %s16
      %p13 = scmp.ge.s32.totalorder %s12, 4
      %s20 = sphi 0, %s20
      %s22 = sphi 0, %s20
      %s23 = sphi 0, %s22
      %s37 = sphi 0, %s23
      %s43 = sphi 0, %s45
      %s46 = sphi 0, %s43
      %s47 = sphi 0, %s46
      %s63 = sphi 0, %s47
      %s67 = sphi 0, %s67
      %s69 = sphi 0, %s67
      %s70 = sphi 0, %s69
      %s84 = sphi 0, %s70
      %s90 = sphi 0, %s92
      %s93 = sphi 0, %s90
      %s94 = sphi 0, %s93
      %s110 = sphi 0, %s94
    $region4: #{tpu_custom_call.1} parent=1 // loop_header_branch
      %15 = sbr.rel (%p13) target = $region8
    $region5: #{tpu_custom_call.1} parent=1 // loop_body
      %s17 = ssub.s32 %s12, 1
      %s18 = ssub.s32 %s12, 2
      %s19 = sadd.s32 %s12, 1
      %s21 = sadd.s32 %s20, 1
      %p24 = scmp.eq.s32.totalorder %s12, 1
      %p25 = scmp.ne.s32.totalorder %s20, %s22
      %p26 = scmp.eq.s32.totalorder %s12, 0
      %p27 = por %p25, %p26
      %p28 = scmp.ne.s32.totalorder %s20, %s22
      %p29 = scmp.eq.s32.totalorder %s17, 1
      %p30 = por %p28, %p29
      %p31 = scmp.ne.s32.totalorder %s22, %s23
      %p32 = scmp.eq.s32.totalorder %s17, 0
      %p33 = por %p31, %p32
      %p34 = scmp.ne.s32.totalorder %s22, %s23
      %p35 = scmp.eq.s32.totalorder %s18, 1
      %p36 = por %p34, %p35
      %p38 = scmp.ne.s32.totalorder %s23, %s37
      %p39 = scmp.eq.s32.totalorder %s18, 0
      %p40 = por %p38, %p39
      %s41 = ssub.s32 %s12, %s19
      %p42 = scmp.eq.s32.totalorder %s41, 0
      %s44 = sadd.s32 %s43, 1
      %s45 = scalar_select %p42, %s43, %s44
      %p48 = pneg %p42
      %p49 = scmp.eq.s32.totalorder %s12, 1
      %p50 = por %p48, %p49
      %p51 = scmp.ne.s32.totalorder %s43, %s46
      %p52 = scmp.eq.s32.totalorder %s12, 0
      %p53 = por %p51, %p52
      %p54 = scmp.ne.s32.totalorder %s43, %s46
      %p55 = scmp.eq.s32.totalorder %s17, 1
      %p56 = por %p54, %p55
      %p57 = scmp.ne.s32.totalorder %s46, %s47
      %p58 = scmp.eq.s32.totalorder %s17, 0
      %p59 = por %p57, %p58
      %p60 = scmp.ne.s32.totalorder %s46, %s47
      %p61 = scmp.eq.s32.totalorder %s18, 1
      %p62 = por %p60, %p61
      %p64 = scmp.ne.s32.totalorder %s47, %s63
      %p65 = scmp.eq.s32.totalorder %s18, 0
      %p66 = por %p64, %p65
      %s68 = sadd.s32 %s67, 1
      %p71 = scmp.eq.s32.totalorder %s12, 1
      %p72 = scmp.ne.s32.totalorder %s67, %s69
      %p73 = scmp.eq.s32.totalorder %s12, 0
      %p74 = por %p72, %p73
      %p75 = scmp.ne.s32.totalorder %s67, %s69
      %p76 = scmp.eq.s32.totalorder %s17, 1
      %p77 = por %p75, %p76
      %p78 = scmp.ne.s32.totalorder %s69, %s70
      %p79 = scmp.eq.s32.totalorder %s17, 0
      %p80 = por %p78, %p79
      %p81 = scmp.ne.s32.totalorder %s69, %s70
      %p82 = scmp.eq.s32.totalorder %s18, 1
      %p83 = por %p81, %p82
      %p85 = scmp.ne.s32.totalorder %s70, %s84
      %p86 = scmp.eq.s32.totalorder %s18, 0
      %p87 = por %p85, %p86
      %s88 = ssub.s32 %s12, %s19
      %p89 = scmp.eq.s32.totalorder %s88, 0
      %s91 = sadd.s32 %s90, 1
      %s92 = scalar_select %p89, %s90, %s91
      %p95 = pneg %p89
      %p96 = scmp.eq.s32.totalorder %s12, 1
      %p97 = por %p95, %p96
      %p98 = scmp.ne.s32.totalorder %s90, %s93
      %p99 = scmp.eq.s32.totalorder %s12, 0
      %p100 = por %p98, %p99
      %p101 = scmp.ne.s32.totalorder %s90, %s93
      %p102 = scmp.eq.s32.totalorder %s17, 1
      %p103 = por %p101, %p102
      %p104 = scmp.ne.s32.totalorder %s93, %s94
      %p105 = scmp.eq.s32.totalorder %s17, 0
      %p106 = por %p104, %p105
      %p107 = scmp.ne.s32.totalorder %s93, %s94
      %p108 = scmp.eq.s32.totalorder %s18, 1
      %p109 = por %p107, %p108
      %p111 = scmp.ne.s32.totalorder %s94, %s110
      %p112 = scmp.eq.s32.totalorder %s18, 0
      %p113 = por %p111, %p112
      %p114 = scmp.le.s32.totalorder 1, %s12
      %p115 = scmp.lt.s32.totalorder %s12, 3
      %p116 = pnand %p114, %p115
      %p117 = pneg %p116
      // Predicated region
      $region9: #{tpu_custom_call.1} parent=5 // pred_check
        _
      $region10: #{tpu_custom_call.1} parent=5 // pred_check_branch
        %119 = sbr.rel (%p116) target = $region12
      $region11: #{tpu_custom_call.1} parent=5 // pred_region
        %s120 = ssub.s32 %s12, 1
        // Predicated region
        $region13: #{tpu_custom_call.1} parent=11 // pred_check
          %p121 = pneg %p33
        $region14: #{tpu_custom_call.1} parent=11 // pred_check_branch
          %123 = sbr.rel (%p121) target = $region16
        $region15: #{tpu_custom_call.1} parent=11 // pred_region
          _
        $region16: #{tpu_custom_call.1} parent=11 // pred_fallthru
          _
        // Predicated region
        $region17: #{tpu_custom_call.1} parent=11 // pred_check
          %p124 = pneg %p80
        $region18: #{tpu_custom_call.1} parent=11 // pred_check_branch
          %126 = sbr.rel (%p124) target = $region20
        $region19: #{tpu_custom_call.1} parent=11 // pred_region
          _
        $region20: #{tpu_custom_call.1} parent=11 // pred_fallthru
          _
      $region12: #{tpu_custom_call.1} parent=5 // pred_fallthru
        _
      %p127 = scmp.lt.s32.totalorder %s12, 2
      // Predicated region
      $region21: #{tpu_custom_call.1} parent=5 // pred_check
        %p128 = pneg %p127
      $region22: #{tpu_custom_call.1} parent=5 // pred_check_branch
        %130 = sbr.rel (%p128) target = $region24
      $region23: #{tpu_custom_call.1} parent=5 // pred_region
        // Predicated region
        $region25: #{tpu_custom_call.1} parent=23 // pred_check
          %p131 = pneg %p53
        $region26: #{tpu_custom_call.1} parent=23 // pred_check_branch
          %133 = sbr.rel (%p131) target = $region28
        $region27: #{tpu_custom_call.1} parent=23 // pred_region
          %s134 = sand.u32 %s43, 1
          %s135 = scalar_lea.sflag [#allocation3], %s134
          %s136 = sand.u32 %s43, 1
          %s137 = smul.addr %s136, 128
          %s138 = scalar_lea.vmem [#allocation2], %s137
          %s140 = ssub.s32 2048, 2048
          %141 = vsyncadd %s135, %s140
          %s142 = smul.addr %s12, 16
          %s143 = smul.addr %s142, 128
          %s144 = scalar_lea.hbm %s1, %s143
          %s145 = sshll.u32 %s138, 4
          %s146 = int_to_ptr.vmem [resolvable:$true] %s145
          %151 = dma.hbm_to_vmem [thread:$0]  %s144, 2048, %s146, %s135, 256, 256, 16
        $region28: #{tpu_custom_call.1} parent=23 // pred_fallthru
          _
      $region24: #{tpu_custom_call.1} parent=5 // pred_fallthru
        _
      %p152 = scmp.le.s32.totalorder 1, %s12
      %p153 = scmp.lt.s32.totalorder %s12, 3
      %p154 = pnand %p152, %p153
      %p155 = pneg %p154
      // Predicated region
      $region29: #{tpu_custom_call.1} parent=5 // pred_check
        _
      $region30: #{tpu_custom_call.1} parent=5 // pred_check_branch
        %157 = sbr.rel (%p154) target = $region32
      $region31: #{tpu_custom_call.1} parent=5 // pred_region
        %s158 = ssub.s32 %s12, 1
        %s159 = sand.u32 %s46, 1
        %s160 = scalar_lea.sflag [#allocation3], %s159
        %s161 = sand.u32 %s46, 1
        %s162 = smul.addr %s161, 128
        %s163 = scalar_lea.vmem [#allocation2], %s162
        // Predicated region
        $region33: #{tpu_custom_call.1} parent=31 // pred_check
          %p164 = pneg %p59
        $region34: #{tpu_custom_call.1} parent=31 // pred_check_branch
          %166 = sbr.rel (%p164) target = $region36
        $region35: #{tpu_custom_call.1} parent=31 // pred_region
          %167 = dma.done %s160, 2048
        $region36: #{tpu_custom_call.1} parent=31 // pred_fallthru
          _
        %p168 = pneg %p33
        %p169 = pneg %p30
        %s170 = sand.u32 %s46, 1
        %s171 = scalar_lea.sflag [#allocation3], %s170
        %s172 = sand.u32 %s46, 1
        %s173 = smul.addr %s172, 128
        %s174 = scalar_lea.vmem [#allocation2], %s173
        %p175 = pneg %p59
        %p176 = pneg %p56
        %p177 = pneg %p80
        %p178 = pneg %p77
        %p179 = pneg %p106
        %p180 = pneg %p103
        %p181 = scmp.lt.s32.totalorder %s17, 1
        %s182 = scalar_select %p181, %s17, 1
        %s183 = smul.addr %s182, 2
        %s184 = smul.addr %s183, 8
        %s185 = scalar_lea.vmem %s3, %s184
        %p186 = scmp.lt.s32.totalorder %s17, 1
        %s187 = scalar_select %p186, %s17, 1
        %s188 = smul.addr %s187, 2
        %s189 = smul.addr %s188, 8
        %s190 = scalar_lea.vmem %s3, %s189
        %v191 = vld [vmem:[%s0] sm:$0x3f]
        %v192 = vld [vmem:[%s2] sm:$0x3f]
        %v193 = vld [vmem:[%s163] sm:$0xff]
        %v194 = vld [vmem:[%s163 + $0x8] sm:$0xff]
        %v195 = vld [vmem:[%s163 + $0x10] sm:$0xff]
        %v196 = vld [vmem:[%s163 + $0x18] sm:$0xff]
        %v197 = vld [vmem:[%s163 + $0x20] sm:$0xff]
        %v198 = vld [vmem:[%s163 + $0x28] sm:$0xff]
        %v199 = vld [vmem:[%s163 + $0x30] sm:$0xff]
        %v200 = vld [vmem:[%s163 + $0x38] sm:$0xff]
        %v201 = vld [vmem:[%s163 + $0x40] sm:$0xff]
        %v202 = vld [vmem:[%s163 + $0x48] sm:$0xff]
        %v203 = vld [vmem:[%s163 + $0x50] sm:$0xff]
        %v204 = vld [vmem:[%s163 + $0x58] sm:$0xff]
        %v205 = vld [vmem:[%s163 + $0x60] sm:$0xff]
        %v206 = vld [vmem:[%s163 + $0x68] sm:$0xff]
        %v207 = vld [vmem:[%s163 + $0x70] sm:$0xff]
        %v208 = vld [vmem:[%s163 + $0x78] sm:$0xff]
        %210 = vset.pattern.permute.xlu0 0
        %211 = vperm.xlu0 %210, %v192
        %v212 = vpop.permute.xlu0 %211
        %vm214 = vcmask 523264
        %v216 = vsel %vm214, %v191, 0
        %218 = vmatprep.subr.mxu0 0.0
        %219 = vmatpush1.msra.mxu0 0.0
        %220 = vmatprep.subr.mxu0 0.0
        %221 = vmatpush1.msra.mxu0 0.0
        %222 = vmatprep.subr.mxu0 0.0
        %223 = vmatpush1.msra.mxu0 0.0
        %224 = vmatprep.subr.mxu0 0.0
        %225 = vmatpush1.msra.mxu0 0.0
        %226 = vmatprep.subr.mxu0 0.0
        %227 = vmatpush1.msra.mxu0 0.0
        %228 = vmatprep.subr.mxu0 0.0
        %229 = vmatpush1.msra.mxu0 0.0
        %230 = vmatprep.subr.mxu0 0.0
        %231 = vmatpush1.msra.mxu0 0.0
        %232 = vmatprep.subr.mxu0 0.0
        %233 = vmatpush1.msra.mxu0 0.0
        %234 = vmatprep.subr.mxu0 %v208
        %235 = vmatpush1.msra.mxu0 %v207
        %236 = vmatprep.subr.mxu0 %v206
        %237 = vmatpush1.msra.mxu0 %v205
        %238 = vmatprep.subr.mxu0 %v204
        %239 = vmatpush1.msra.mxu0 %v203
        %240 = vmatprep.subr.mxu0 %v202
        %241 = vmatpush1.msra.mxu0 %v201
        %242 = vmatprep.subr.mxu0 %v200
        %243 = vmatpush1.msra.mxu0 %v199
        %244 = vmatprep.subr.mxu0 %v198
        %245 = vmatpush1.msra.mxu0 %v197
        %246 = vmatprep.subr.mxu0 %v196
        %247 = vmatpush1.msra.mxu0 %v195
        %248 = vmatprep.subr.mxu0 %v194
        %249 = vmatpush1.msra.mxu0 %v193
        %250 = vmatprep.subr.mxu0 0.0
        %251 = vmatpush2.msra.mxu0 0.0
        %252 = vmatprep.subr.mxu0 0.0
        %253 = vmatpush2.msra.mxu0 0.0
        %254 = vmatprep.subr.mxu0 0.0
        %255 = vmatpush2.msra.mxu0 0.0
        %256 = vmatprep.subr.mxu0 0.0
        %257 = vmatpush2.msra.mxu0 0.0
        %258 = vmatprep.subr.mxu0 0.0
        %259 = vmatpush2.msra.mxu0 0.0
        %260 = vmatprep.subr.mxu0 0.0
        %261 = vmatpush2.msra.mxu0 0.0
        %262 = vmatprep.subr.mxu0 0.0
        %263 = vmatpush2.msra.mxu0 0.0
        %264 = vmatprep.subr.mxu0 0.0
        %265 = vmatpush2.msra.mxu0 0.0
        %266 = vmatprep.subr.mxu0 0.0
        %267 = vmatpush2.msra.mxu0 0.0
        %268 = vmatprep.subr.mxu0 0.0
        %269 = vmatpush2.msra.mxu0 0.0
        %270 = vmatprep.subr.mxu0 0.0
        %271 = vmatpush2.msra.mxu0 0.0
        %272 = vmatprep.subr.mxu0 0.0
        %273 = vmatpush2.msra.mxu0 0.0
        %274 = vmatprep.subr.mxu0 0.0
        %275 = vmatpush2.msra.mxu0 0.0
        %276 = vmatprep.subr.mxu0 0.0
        %277 = vmatpush2.msra.mxu0 0.0
        %278 = vmatprep.subr.mxu0 0.0
        %279 = vmatpush2.msra.mxu0 0.0
        %280 = vmatprep.subr.mxu0 0.0
        %281 = vmatpush2.msra.mxu0 0.0
        %282 = vmatprep.mubr.f32.mxu0 0.0
        %283 = vmatmul.mubr.f32.gmra.mxu0 %v216
        %v284 = vpop.f32.mrf.mxu0
        %v285 = vadd.f32 %v212, %v284
        %v286 = vpop.f32.mrf.mxu0
        %v287 = vadd.f32 %v212, %v286
        %288 = vdwg.mxu0
        %289 = vst [vmem:[%s190] sm:$0x3f] %v285
        %290 = vst [vmem:[%s190 + $0x8] sm:$0x3f] %v287
        %p291 = scmp.lt.s32.totalorder %s17, 1
        %s292 = scalar_select %p291, %s17, 1
        %s293 = smul.addr %s292, 2
        %s294 = smul.addr %s293, 8
        %s295 = scalar_lea.vmem %s3, %s294
        // Predicated region
        $region37: #{tpu_custom_call.1} parent=31 // pred_check
          %p296 = pneg %p103
        $region38: #{tpu_custom_call.1} parent=31 // pred_check_branch
          %298 = sbr.rel (%p296) target = $region40
        $region39: #{tpu_custom_call.1} parent=31 // pred_region
          _
        $region40: #{tpu_custom_call.1} parent=31 // pred_fallthru
          _
      $region32: #{tpu_custom_call.1} parent=5 // pred_fallthru
        _
      %p299 = scmp.le.s32.totalorder 2, %s12
      // Predicated region
      $region41: #{tpu_custom_call.1} parent=5 // pred_check
        %p300 = pneg %p299
      $region42: #{tpu_custom_call.1} parent=5 // pred_check_branch
        %302 = sbr.rel (%p300) target = $region44
      $region43: #{tpu_custom_call.1} parent=5 // pred_region
        %s303 = ssub.s32 %s12, 2
        // Predicated region
        $region45: #{tpu_custom_call.1} parent=43 // pred_check
          %p304 = pneg %p109
        $region46: #{tpu_custom_call.1} parent=43 // pred_check_branch
          %306 = sbr.rel (%p304) target = $region48
        $region47: #{tpu_custom_call.1} parent=43 // pred_region
          %p307 = scmp.lt.s32.totalorder %s18, 1
          %s308 = scalar_select %p307, %s18, 1
          %s309 = smul.addr %s308, 2
          %s310 = smul.addr %s309, 8
          %s311 = scalar_lea.vmem %s3, %s310
        $region48: #{tpu_custom_call.1} parent=43 // pred_fallthru
          _
      $region44: #{tpu_custom_call.1} parent=5 // pred_fallthru
        _
    $region6: #{tpu_custom_call.1} parent=1 // loop_footer
      %s16 = sadd.s32 1, %s12
    $region7: #{tpu_custom_call.1} parent=1 // loop_footer_branch
      %11 = sbr.rel target = $region3
    $region8: #{tpu_custom_call.1} parent=1 // loop_exit
      _
    %312 = vsyncpa [#allocation3], 1
    %s313 = scalar_lea.sflag [#allocation3], 1
    %314 = vsyncpa %s313, 1

</llo_original>
